<compile_context>
chip_gen: v7x
topology: tpu7x:2x2x1
jax: 0.10.0
libtpu: 0.0.40
codegen_flags: <defaults>
</compile_context>

<pallas_src>
import functools

import jax
import jax.numpy as jnp
from jax.experimental import pallas as pl
from jax.experimental.pallas import tpu as pltpu


# --------------------------------------------------------------------------- #
# Kernels
# --------------------------------------------------------------------------- #
def _demosaic_nchw_kernel(ph_ref, uhc_ref, uw_ref, o_ref):
    # ph_ref : (1, 4h, w)     Bayer phases of one batch element (input dtype)
    # uhc_ref: (1, th, 4h)    bf16 conv-weight-folded row-upsample operator (chan c)
    # uw_ref : (w, W)         bf16 column-upsample operator (transposed)
    # o_ref  : (1, 1, th, W)  f32 output tile, written directly in NCHW layout
    ph = ph_ref[0].astype(jnp.bfloat16)                                   # (4h, w)
    t = jnp.dot(uhc_ref[0], ph, preferred_element_type=jnp.float32)       # (th, w)
    o_ref[0, 0] = jnp.dot(t.astype(jnp.bfloat16), uw_ref[...],
                          preferred_element_type=jnp.float32)             # (th, W)


def _demosaic_packed_kernel(ph_ref, uhc_ref, uw_ref, o_ref, *, bt, w, W):
    # ph_ref : (4h, bt*w)     phases of bt batch elements packed along lanes
    # uhc_ref: (1, H, 4h)     bf16 conv-weight-folded row-upsample operator (chan c)
    # uw_ref : (w, W)         bf16 column-upsample operator (transposed)
    # o_ref  : (1, H, bt*W)   f32 lane-packed output slab for channel c
    ph = ph_ref[...].astype(jnp.bfloat16)                                 # (4h, bt*w)
    t = jnp.dot(uhc_ref[0], ph, preferred_element_type=jnp.float32)       # (H, bt*w)
    tb = t.astype(jnp.bfloat16)
    uw = uw_ref[...]
    # Per-image column upsample with ONE (w, W) operator (no block-diag kron):
    # static lane sub-slices, results concatenated for a single lane-dense store.
    cols = [jnp.dot(tb[:, b * w:(b + 1) * w], uw,
                    preferred_element_type=jnp.float32) for b in range(bt)]
    o_ref[0] = cols[0] if bt == 1 else jnp.concatenate(cols, axis=-1)


# --------------------------------------------------------------------------- #
# Operator construction / tiling heuristics
# --------------------------------------------------------------------------- #
def _upsample_matrix(out_size, in_size):
    """Dense (out_size, in_size) matrix of PyTorch bilinear upsampling with
    align_corners=False (half-pixel centers, source coordinate clamped at 0)."""
    i = jnp.arange(out_size, dtype=jnp.float32)
    src = jnp.maximum((i + 0.5) * (in_size / out_size) - 0.5, 0.0)
    idx0 = jnp.floor(src).astype(jnp.int32)
    idx1 = jnp.minimum(idx0 + 1, in_size - 1)
    lam = src - idx0.astype(jnp.float32)
    rows = jnp.arange(out_size)
    u = jnp.zeros((out_size, in_size), jnp.float32)
    u = u.at[rows, idx0].add(1.0 - lam)
    u = u.at[rows, idx1].add(lam)
    return u


def _choose_batch_tile(bsz, w):
    """Smallest divisor bt of bsz with bt*w a multiple of 128 (lane-dense packing).
    Returns 1 when packing is impossible or unnecessary (w already lane-dense)."""
    for bt in range(1, bsz + 1):
        if bsz % bt == 0 and (bt * w) % 128 == 0:
            return bt
    return 1  # fallback: per-image NCHW path (masked stores, still correct)


def _choose_h_tile(H):
    """H-tile for the direct-NCHW path: bounds the output / row-operator blocks."""
    if H <= 512:
        return H
    for th in (512, 256, 128, 64, 32, 16, 8):
        if H % th == 0:
            return th
    return H


def _vmem_limit_bytes():
    """Generation-aware scoped-VMEM limit (~54 MiB on v7x, 96 MiB on v5e/v6e)."""
    try:
        cap = int(pltpu.get_tpu_info().vmem_capacity_bytes)
    except Exception:
        cap = 64 * 1024 * 1024
    return max(32 * 1024 * 1024, min(int(cap * 0.85), 96 * 1024 * 1024))


# --------------------------------------------------------------------------- #
# Forward wrapper
# --------------------------------------------------------------------------- #
@jax.jit
def demosaic_forward(mosaic, kernel):
    """mosaic: [B, H, W] (H, W even); kernel: [3, 1, 2, 2] -> [B, 3, H, W] f32."""
    bsz, H, W = mosaic.shape
    h, w = H // 2, W // 2

    # Bilinear operators (coefficients 0/.25/.75/1 are exact in bf16).
    u_h = _upsample_matrix(H, h)                                    # (H, h) f32
    u_wT = _upsample_matrix(W, w).T.astype(jnp.bfloat16)            # (w, W) bf16

    # Fold the learnable 2x2 conv weights into the row operator: (3, H, 4h).
    k_flat = kernel.reshape(3, 4).astype(jnp.float32)               # [c, 2*pr + pc]
    uh_all = (k_flat[:, :, None, None] * u_h[None, None, :, :]
              ).transpose(0, 2, 1, 3).reshape(3, H, 4 * h).astype(jnp.bfloat16)

    vmem_limit = _vmem_limit_bytes()
    flops = 3 * bsz * 2 * H * w * (4 * h + W)
    out_bytes = 3 * bsz * H * W * 4

    bt = _choose_batch_tile(bsz, w)

    if bt > 1:
        # ------- lane-packed path: bt small images share the 128-lane axis ------
        nb = bsz // bt
        # phases[p*h + y, b*w + x] = mosaic[b, 2y + pr, 2x + pc], p = 2*pr + pc
        phases = (mosaic.reshape(bsz, h, 2, w, 2)
                  .transpose(2, 4, 1, 0, 3)                 # (pr, pc, y, b, x)
                  .reshape(4 * h, bsz * w))
        bytes_accessed = (phases.size * phases.dtype.itemsize
                          + uh_all.size * 2 + u_wT.size * 2 + out_bytes)
        out_packed = pl.pallas_call(
            functools.partial(_demosaic_packed_kernel, bt=bt, w=w, W=W),
            out_shape=jax.ShapeDtypeStruct((3, H, bsz * W), jnp.float32),
            grid=(nb, 3),
            in_specs=[
                pl.BlockSpec((4 * h, bt * w), lambda i, c: (0, i)),    # phases
                pl.BlockSpec((1, H, 4 * h), lambda i, c: (c, 0, 0)),   # uh_all[c]
                pl.BlockSpec((w, W), lambda i, c: (0, 0)),             # u_wT
            ],
            out_specs=pl.BlockSpec((1, H, bt * W), lambda i, c: (c, 0, i)),
            compiler_params=pltpu.CompilerParams(
                dimension_semantics=("parallel", "parallel"),
                vmem_limit_bytes=vmem_limit),
            cost_estimate=pl.CostEstimate(flops=flops, transcendentals=0,
                                          bytes_accessed=bytes_accessed),
        )(phases, uh_all, u_wT)
        # Lane-packed (3, H, B*W) -> NCHW; only taken for small images, so the
        # extra transpose traffic is negligible.
        return out_packed.reshape(3, H, bsz, W).transpose(2, 0, 1, 3)

    # ------- direct-NCHW path: kernel writes [B, 3, H, W] blocks directly ------
    th = _choose_h_tile(H)
    nt = H // th
    # phases[b, p*h + y, x] = mosaic[b, 2y + pr, 2x + pc], p = 2*pr + pc
    phases = (mosaic.reshape(bsz, h, 2, w, 2)
              .transpose(0, 2, 4, 1, 3)                     # (b, pr, pc, y, x)
              .reshape(bsz, 4 * h, w))
    bytes_accessed = (phases.size * phases.dtype.itemsize
                      + uh_all.size * 2 + u_wT.size * 2 + out_bytes)
    return pl.pallas_call(
        _demosaic_nchw_kernel,
        out_shape=jax.ShapeDtypeStruct((bsz, 3, H, W), jnp.float32),
        grid=(bsz, 3, nt),
        in_specs=[
            pl.BlockSpec((1, 4 * h, w), lambda b, c, t: (b, 0, 0)),    # phases[b]
            pl.BlockSpec((1, th, 4 * h), lambda b, c, t: (c, t, 0)),   # uh_all[c]
            pl.BlockSpec((w, W), lambda b, c, t: (0, 0)),              # u_wT
        ],
        out_specs=pl.BlockSpec((1, 1, th, W), lambda b, c, t: (b, c, t, 0)),
        compiler_params=pltpu.CompilerParams(
            dimension_semantics=("parallel", "parallel", "parallel"),
            vmem_limit_bytes=vmem_limit),
        cost_estimate=pl.CostEstimate(flops=flops, transcendentals=0,
                                      bytes_accessed=bytes_accessed),
    )(phases, uh_all, u_wT)


# --------------------------------------------------------------------------- #
# Pure-JAX reference (independent of the kernel formulation)
# --------------------------------------------------------------------------- #
def _ref_forward(mosaic, kernel):
    """Reference: conv via einsum, bilinear upsample via gather (f32)."""
    bsz, H, W = mosaic.shape
    h, w = H // 2, W // 2
    m = mosaic.reshape(bsz, h, 2, w, 2)      # m[b, y, p, x, q] = mosaic[b, 2y+p, 2x+q]
    lr = jnp.einsum('bypxq,cpq->bcyx', m, kernel[:, 0], precision='highest')

    def upsample_axis(x, axis, out_size):
        in_size = x.shape[axis]
        i = jnp.arange(out_size, dtype=jnp.float32)
        src = jnp.maximum((i + 0.5) * (in_size / out_size) - 0.5, 0.0)
        idx0 = jnp.floor(src).astype(jnp.int32)
        idx1 = jnp.minimum(idx0 + 1, in_size - 1)
        lam = src - idx0.astype(jnp.float32)
        x0 = jnp.take(x, idx0, axis=axis)
        x1 = jnp.take(x, idx1, axis=axis)
        shp = [1] * x.ndim
        shp[axis] = out_size
        lam = lam.reshape(shp)
        return (1.0 - lam) * x0 + lam * x1

    up = upsample_axis(lr, 2, H)
    up = upsample_axis(up, 3, W)
    return up


if __name__ == "__main__":
    key = jax.random.PRNGKey(0)
    k1, k2 = jax.random.split(key)

    # Deterministic parameter init, mirroring Demosaic.__init__ exactly.
    kernel = (jnp.zeros((3, 1, 2, 2), jnp.float32)
              .at[0, 0, 0, 0].set(1.0)
              .at[1, 0, 0, 1].set(0.5)
              .at[1, 0, 1, 0].set(0.5)
              .at[2, 0, 1, 1].set(1.0))

    # bf16 single-pass MXU matmuls: ~2e-3 relative error on O(1) data, so the
    # self-check tolerance is 5e-2 absolute (was 5e-4 for the 3-pass f32 path).
    TOL = 5e-2

    # Path 1: direct-NCHW path (small batch -> no lane packing possible).
    mosaic_a = jax.random.normal(k1, (2, 16, 16), dtype=jnp.float32)
    out_a = jax.block_until_ready(demosaic_forward(mosaic_a, kernel))
    assert out_a.shape == (2, 3, 16, 16), out_a.shape
    err_a = float(jnp.max(jnp.abs(out_a - _ref_forward(mosaic_a, kernel))))
    assert err_a < TOL, f"NCHW path max abs error {err_a}"

    # Path 2: lane-packed path (16 images of width 16 fill the 128-lane axis).
    mosaic_b = jax.random.normal(k2, (16, 16, 16), dtype=jnp.float32)
    out_b = jax.block_until_ready(demosaic_forward(mosaic_b, kernel))
    assert out_b.shape == (16, 3, 16, 16), out_b.shape
    err_b = float(jnp.max(jnp.abs(out_b - _ref_forward(mosaic_b, kernel))))
    assert err_b < TOL, f"packed path max abs error {err_b}"

    print("KERNEL_OK")
</pallas_src>

<mosaic_0001>
module attributes {stable_mosaic.version = 11 : i64} {
  func.func private @main(%arg0: i32) attributes {dimension_semantics = [#tpu.dimension_semantics<core_parallel>], iteration_bounds = array<i64: 2>, tpu.core_type = #tpu.core_type<sc_scalar_subcore>, window_params = []} {
    return
  }
}

module attributes {stable_mosaic.version = 11 : i64} {
  func.func private @main(%arg0: i32) attributes {dimension_semantics = [#tpu.dimension_semantics<core_parallel>], iteration_bounds = array<i64: 2>, tpu.core_type = #tpu.core_type<sc_scalar_subcore>, window_params = []} {
    return
  }
}

module attributes {stable_mosaic.version = 11 : i64} {
  func.func @_demosaic_nchw_kernel(%arg0: i32, %arg1: i32, %arg2: i32, %arg3: memref<1x32x8xf32, #tpu.memory_space<vmem>>, %arg4: memref<1x16x32xbf16, #tpu.memory_space<vmem>>, %arg5: memref<8x16xbf16, #tpu.memory_space<vmem>>, %arg6: memref<1x1x16x16xf32, #tpu.memory_space<vmem>>) attributes {dimension_semantics = [#tpu.dimension_semantics<parallel>, #tpu.dimension_semantics<parallel>, #tpu.dimension_semantics<parallel>], iteration_bounds = array<i64: 2, 3, 1>, scalar_prefetch = 0 : i64, scratch_operands = 0 : i64, tpu.core_type = #tpu.core_type<tc>, window_params = [{transform_indices = @transform_0, window_bounds = array<i64: 1, 32, 8>}, {transform_indices = @transform_1, window_bounds = array<i64: 1, 16, 32>}, {pipeline_mode = #tpu.pipeline_mode<synchronous>, transform_indices = @transform_2, window_bounds = array<i64: 8, 16>}, {transform_indices = @transform_3, window_bounds = array<i64: 1, 1, 16, 16>}]} {
    %c0 = arith.constant 0 : index
    %c0_0 = arith.constant 0 : index
    %c0_1 = arith.constant 0 : index
    %0 = vector.load %arg3[%c0, %c0_0, %c0_1] : memref<1x32x8xf32, #tpu.memory_space<vmem>>, vector<1x32x8xf32>
    %1 = vector.shape_cast %0 : vector<1x32x8xf32> to vector<32x8xf32>
    %2 = arith.truncf %1 : vector<32x8xf32> to vector<32x8xbf16>
    %c0_2 = arith.constant 0 : index
    %c0_3 = arith.constant 0 : index
    %c0_4 = arith.constant 0 : index
    %3 = vector.load %arg4[%c0_2, %c0_3, %c0_4] : memref<1x16x32xbf16, #tpu.memory_space<vmem>>, vector<1x16x32xbf16>
    %4 = vector.shape_cast %3 : vector<1x16x32xbf16> to vector<16x32xbf16>
    %cst = arith.constant dense<0.000000e+00> : vector<16x8xf32>
    %5 = tpu.matmul %4, %2, %cst {dimension_numbers = #tpu.dot_dimension_numbers<[1], [0], [0], [1], [0, 0, 1, 1], [], []>} : vector<16x32xbf16>, vector<32x8xbf16>, vector<16x8xf32> -> vector<16x8xf32>
    %6 = arith.truncf %5 : vector<16x8xf32> to vector<16x8xbf16>
    %c0_5 = arith.constant 0 : index
    %c0_6 = arith.constant 0 : index
    %7 = vector.load %arg5[%c0_5, %c0_6] : memref<8x16xbf16, #tpu.memory_space<vmem>>, vector<8x16xbf16>
    %cst_7 = arith.constant dense<0.000000e+00> : vector<16x16xf32>
    %8 = tpu.matmul %6, %7, %cst_7 {dimension_numbers = #tpu.dot_dimension_numbers<[1], [0], [0], [1], [0, 0, 1, 1], [], []>} : vector<16x8xbf16>, vector<8x16xbf16>, vector<16x16xf32> -> vector<16x16xf32>
    %c0_8 = arith.constant 0 : index
    %c0_9 = arith.constant 0 : index
    %c0_10 = arith.constant 0 : index
    %c0_11 = arith.constant 0 : index
    %9 = vector.load %arg6[%c0_8, %c0_9, %c0_10, %c0_11] : memref<1x1x16x16xf32, #tpu.memory_space<vmem>>, vector<1x1x16x16xf32>
    %10 = vector.shape_cast %9 : vector<1x1x16x16xf32> to vector<16x16xf32>
    %11 = vector.shape_cast %8 : vector<16x16xf32> to vector<1x1x16x16xf32>
    tpu.vector_store %arg6[%c0_8, %c0_9, %c0_10, %c0_11], %11 {strides = array<i32>} : memref<1x1x16x16xf32, #tpu.memory_space<vmem>>, vector<1x1x16x16xf32>,
    return
  }
  func.func @transform_0(%arg0: i32, %arg1: i32, %arg2: i32) -> (i32, i32, i32) {
    %c0_i32 = arith.constant 0 : i32
    %c0_i32_0 = arith.constant 0 : i32
    %c0_i32_1 = arith.constant 0 : i32
    return %arg0, %c0_i32, %c0_i32_0 : i32, i32, i32
  }
  func.func @transform_1(%arg0: i32, %arg1: i32, %arg2: i32) -> (i32, i32, i32) {
    %c0_i32 = arith.constant 0 : i32
    %c0_i32_0 = arith.constant 0 : i32
    return %arg1, %arg2, %c0_i32 : i32, i32, i32
  }
  func.func @transform_2(%arg0: i32, %arg1: i32, %arg2: i32) -> (i32, i32) {
    %c0_i32 = arith.constant 0 : i32
    %c0_i32_0 = arith.constant 0 : i32
    %c0_i32_1 = arith.constant 0 : i32
    return %c0_i32, %c0_i32_0 : i32, i32
  }
  func.func @transform_3(%arg0: i32, %arg1: i32, %arg2: i32) -> (i32, i32, i32, i32) {
    %c0_i32 = arith.constant 0 : i32
    %c0_i32_0 = arith.constant 0 : i32
    return %arg0, %arg1, %arg2, %c0_i32 : i32, i32, i32, i32
  }
}

</mosaic_0001>

<llo_original>
// kernel: demosaic_forward.1
$region0: #{demosaic_forward.1}
  #allocation0 [shape = 'u32[]', space=smem, size = 0x4, offset = 0x4, fixed_abs, tag = 'smem constant byte address 0x4 - core index']
  #allocation1 [shape = 'u32[144,128]{1,0:T(1,128)}', space=vmem, size = 0x12000, scoped, tag = 'internal scratch']
  %s0 = inlined_call_operand.vmem [shape: f32[2,32,8], index: 0, kind: input, shape index: {}]
  %s1 = inlined_call_operand.vmem [shape: bf16[3,16,32], index: 1, kind: input, shape index: {}]
  %s2 = inlined_call_operand.vmem [shape: bf16[8,16], index: 2, kind: input, shape index: {}]
  %s3 = inlined_call_operand.hbm [shape: f32[2,3,16,16], index: 3, kind: output, shape index: {}]
  %s4 = sld [smem:[#allocation0]]
  $region45: #{demosaic_forward.1} parent=0
    _
  %s6 = ssub.s32 1, %s4
  %s7 = scalar_select 0, %s6, %s4
  $region1: #{demosaic_forward.1} parent=0
    #allocation2 [shape = 'u8[16384]{0}', space=vmem, size = 0x4000, scoped, tag = 'output window, operand 0']
    #allocation3 [shape = 's32[2]{0}', space=sflag, size = 0x8, scoped, tag = 'scoped memory for demosaic_forward.1']
    %8 = vsyncpa [#allocation3], 0
    %s9 = scalar_lea.sflag [#allocation3], 1
    %10 = vsyncpa %s9, 0
    loop: start=0, step=1, limit=8
    $region2: #{demosaic_forward.1} parent=1 // loop_pre_header
      _
    $region3: #{demosaic_forward.1} parent=1 // loop_header
      %s12 = sphi 0, %s16
      %p13 = scmp.ge.s32.totalorder %s12, 8
      %s19 = sphi 0, %s38
      %s20 = sphi 0, %s34
      %s21 = sphi 0, %s30
      %s22 = sphi 0, %s19
      %s23 = sphi 0, %s20
      %s24 = sphi 0, %s21
      %s25 = sphi 0, %s22
      %s26 = sphi 0, %s23
      %s27 = sphi 0, %s24
      %s41 = sphi 0, %s43
      %s44 = sphi 0, %s41
      %s45 = sphi 0, %s44
      %s61 = sphi 0, %s45
      %s69 = sphi 0, %s71
      %s72 = sphi 0, %s69
      %s73 = sphi 0, %s72
      %s89 = sphi 0, %s73
      %s93 = sphi 0, %s93
      %s95 = sphi 0, %s93
      %s96 = sphi 0, %s95
      %s110 = sphi 0, %s96
      %s120 = sphi 0, %s122
      %s123 = sphi 0, %s120
      %s124 = sphi 0, %s123
      %s140 = sphi 0, %s124
    $region4: #{demosaic_forward.1} parent=1 // loop_header_branch
      %15 = sbr.rel (%p13) target = $region8
    $region5: #{demosaic_forward.1} parent=1 // loop_body
      %s17 = ssub.s32 %s12, 1
      %s18 = ssub.s32 %s12, 2
      %s28 = sadd.s32 1, %s21
      %p29 = scmp.ge.s32.totalorder %s28, 1
      %s30 = scalar_select %p29, 0, %s28
      %s31 = sadd.s32 1, %s20
      %s32 = scalar_select %p29, %s31, %s20
      %p33 = scmp.ge.s32.totalorder %s32, 3
      %s34 = scalar_select %p33, 0, %s32
      %s35 = sadd.s32 1, %s19
      %s36 = scalar_select %p33, %s35, %s19
      %p37 = scmp.ge.s32.totalorder %s36, 2
      %s38 = scalar_select %p37, 0, %s36
      %s39 = ssub.s32 %s19, %s38
      %p40 = scmp.eq.s32.totalorder %s39, 0
      %s42 = sadd.s32 %s41, 1
      %s43 = scalar_select %p40, %s41, %s42
      %p46 = pneg %p40
      %p47 = scmp.eq.s32.totalorder %s12, 5
      %p48 = por %p46, %p47
      %p49 = scmp.ne.s32.totalorder %s41, %s44
      %p50 = scmp.eq.s32.totalorder %s12, 0
      %p51 = por %p49, %p50
      %p52 = scmp.ne.s32.totalorder %s41, %s44
      %p53 = scmp.eq.s32.totalorder %s17, 5
      %p54 = por %p52, %p53
      %p55 = scmp.ne.s32.totalorder %s44, %s45
      %p56 = scmp.eq.s32.totalorder %s17, 0
      %p57 = por %p55, %p56
      %p58 = scmp.ne.s32.totalorder %s44, %s45
      %p59 = scmp.eq.s32.totalorder %s18, 5
      %p60 = por %p58, %p59
      %p62 = scmp.ne.s32.totalorder %s45, %s61
      %p63 = scmp.eq.s32.totalorder %s18, 0
      %p64 = por %p62, %p63
      %s65 = ssub.s32 %s20, %s34
      %s66 = ssub.s32 %s21, %s30
      %s67 = sor.u32 %s65, %s66
      %p68 = scmp.eq.s32.totalorder %s67, 0
      %s70 = sadd.s32 %s69, 1
      %s71 = scalar_select %p68, %s69, %s70
      %p74 = pneg %p68
      %p75 = scmp.eq.s32.totalorder %s12, 5
      %p76 = por %p74, %p75
      %p77 = scmp.ne.s32.totalorder %s69, %s72
      %p78 = scmp.eq.s32.totalorder %s12, 0
      %p79 = por %p77, %p78
      %p80 = scmp.ne.s32.totalorder %s69, %s72
      %p81 = scmp.eq.s32.totalorder %s17, 5
      %p82 = por %p80, %p81
      %p83 = scmp.ne.s32.totalorder %s72, %s73
      %p84 = scmp.eq.s32.totalorder %s17, 0
      %p85 = por %p83, %p84
      %p86 = scmp.ne.s32.totalorder %s72, %s73
      %p87 = scmp.eq.s32.totalorder %s18, 5
      %p88 = por %p86, %p87
      %p90 = scmp.ne.s32.totalorder %s73, %s89
      %p91 = scmp.eq.s32.totalorder %s18, 0
      %p92 = por %p90, %p91
      %s94 = sadd.s32 %s93, 1
      %p97 = scmp.eq.s32.totalorder %s12, 5
      %p98 = scmp.ne.s32.totalorder %s93, %s95
      %p99 = scmp.eq.s32.totalorder %s12, 0
      %p100 = por %p98, %p99
      %p101 = scmp.ne.s32.totalorder %s93, %s95
      %p102 = scmp.eq.s32.totalorder %s17, 5
      %p103 = por %p101, %p102
      %p104 = scmp.ne.s32.totalorder %s95, %s96
      %p105 = scmp.eq.s32.totalorder %s17, 0
      %p106 = por %p104, %p105
      %p107 = scmp.ne.s32.totalorder %s95, %s96
      %p108 = scmp.eq.s32.totalorder %s18, 5
      %p109 = por %p107, %p108
      %p111 = scmp.ne.s32.totalorder %s96, %s110
      %p112 = scmp.eq.s32.totalorder %s18, 0
      %p113 = por %p111, %p112
      %s114 = ssub.s32 %s19, %s38
      %s115 = ssub.s32 %s20, %s34
      %s116 = sor.u32 %s114, %s115
      %s117 = ssub.s32 %s21, %s30
      %s118 = sor.u32 %s116, %s117
      %p119 = scmp.eq.s32.totalorder %s118, 0
      %s121 = sadd.s32 %s120, 1
      %s122 = scalar_select %p119, %s120, %s121
      %p125 = pneg %p119
      %p126 = scmp.eq.s32.totalorder %s12, 5
      %p127 = por %p125, %p126
      %p128 = scmp.ne.s32.totalorder %s120, %s123
      %p129 = scmp.eq.s32.totalorder %s12, 0
      %p130 = por %p128, %p129
      %p131 = scmp.ne.s32.totalorder %s120, %s123
      %p132 = scmp.eq.s32.totalorder %s17, 5
      %p133 = por %p131, %p132
      %p134 = scmp.ne.s32.totalorder %s123, %s124
      %p135 = scmp.eq.s32.totalorder %s17, 0
      %p136 = por %p134, %p135
      %p137 = scmp.ne.s32.totalorder %s123, %s124
      %p138 = scmp.eq.s32.totalorder %s18, 5
      %p139 = por %p137, %p138
      %p141 = scmp.ne.s32.totalorder %s124, %s140
      %p142 = scmp.eq.s32.totalorder %s18, 0
      %p143 = por %p141, %p142
      %p144 = scmp.le.s32.totalorder 1, %s12
      %p145 = scmp.lt.s32.totalorder %s12, 7
      %p146 = pnand %p144, %p145
      %p147 = pneg %p146
      // Predicated region
      $region9: #{demosaic_forward.1} parent=5 // pred_check
        _
      $region10: #{demosaic_forward.1} parent=5 // pred_check_branch
        %149 = sbr.rel (%p146) target = $region12
      $region11: #{demosaic_forward.1} parent=5 // pred_region
        %s150 = ssub.s32 %s12, 1
        // Predicated region
        $region13: #{demosaic_forward.1} parent=11 // pred_check
          %p151 = pneg %p106
        $region14: #{demosaic_forward.1} parent=11 // pred_check_branch
          %153 = sbr.rel (%p151) target = $region16
        $region15: #{demosaic_forward.1} parent=11 // pred_region
          _
        $region16: #{demosaic_forward.1} parent=11 // pred_fallthru
          _
      $region12: #{demosaic_forward.1} parent=5 // pred_fallthru
        _
      %p154 = scmp.lt.s32.totalorder %s12, 6
      // Predicated region
      $region17: #{demosaic_forward.1} parent=5 // pred_check
        %p155 = pneg %p154
      $region18: #{demosaic_forward.1} parent=5 // pred_check_branch
        %157 = sbr.rel (%p155) target = $region20
      $region19: #{demosaic_forward.1} parent=5 // pred_region
        // Predicated region
        $region21: #{demosaic_forward.1} parent=19 // pred_check
          %p158 = pneg %p51
        $region22: #{demosaic_forward.1} parent=19 // pred_check_branch
          %160 = sbr.rel (%p158) target = $region24
        $region23: #{demosaic_forward.1} parent=19 // pred_region
          %p161 = scmp.lt.s32.totalorder %s19, 1
          %s162 = scalar_select %p161, %s19, 1
          %s163 = smul.addr %s162, 4
          %s164 = smul.addr %s163, 8
          %s165 = scalar_lea.vmem %s0, %s164
        $region24: #{demosaic_forward.1} parent=19 // pred_fallthru
          _
        // Predicated region
        $region25: #{demosaic_forward.1} parent=19 // pred_check
          %p166 = pneg %p79
        $region26: #{demosaic_forward.1} parent=19 // pred_check_branch
          %168 = sbr.rel (%p166) target = $region28
        $region27: #{demosaic_forward.1} parent=19 // pred_region
          %s169 = smul.u32 2, %s21
          %p170 = scmp.lt.s32.totalorder %s20, 2
          %s171 = scalar_select %p170, %s20, 2
          %p172 = scmp.lt.s32.totalorder %s169, 1
          %s173 = scalar_select %p172, %s169, 1
          %s174 = smul.addr %s171, 2
          %s175 = sadd.s32 %s173, %s174
          %s176 = smul.addr %s175, 4
          %s177 = scalar_lea.vmem %s1, %s176
          %s178 = smul.u32 2, %s21
        $region28: #{demosaic_forward.1} parent=19 // pred_fallthru
          _
      $region20: #{demosaic_forward.1} parent=5 // pred_fallthru
        _
      %p179 = scmp.le.s32.totalorder 1, %s12
      %p180 = scmp.lt.s32.totalorder %s12, 7
      %p181 = pnand %p179, %p180
      %p182 = pneg %p181
      // Predicated region
      $region29: #{demosaic_forward.1} parent=5 // pred_check
        _
      $region30: #{demosaic_forward.1} parent=5 // pred_check_branch
        %184 = sbr.rel (%p181) target = $region32
      $region31: #{demosaic_forward.1} parent=5 // pred_region
        %s185 = ssub.s32 %s12, 1
        %p186 = scmp.lt.s32.totalorder %s22, 1
        %s187 = scalar_select %p186, %s22, 1
        %s188 = smul.addr %s187, 4
        %s189 = smul.addr %s188, 8
        %s190 = scalar_lea.vmem %s0, %s189
        %p191 = pneg %p57
        %p192 = pneg %p54
        %s193 = smul.u32 2, %s24
        %p194 = scmp.lt.s32.totalorder %s23, 2
        %s195 = scalar_select %p194, %s23, 2
        %p196 = scmp.lt.s32.totalorder %s193, 1
        %s197 = scalar_select %p196, %s193, 1
        %s198 = smul.addr %s195, 2
        %s199 = sadd.s32 %s197, %s198
        %s200 = smul.addr %s199, 4
        %s201 = scalar_lea.vmem %s1, %s200
        %p202 = pneg %p85
        %p203 = pneg %p82
        %p204 = pneg %p106
        %p205 = pneg %p103
        %p206 = pneg %p136
        %p207 = pneg %p133
        %s208 = sand.u32 %s123, 1
        %s209 = scalar_lea.sflag [#allocation3], %s208
        %s210 = sand.u32 %s123, 1
        %s211 = smul.addr %s210, 16
        %s212 = scalar_lea.vmem [#allocation2], %s211
        %p213 = scmp.lt.s32.totalorder %s22, 1
        %s214 = scalar_select %p213, %s22, 1
        %s215 = smul.addr %s214, 4
        %s216 = smul.addr %s215, 8
        %s217 = scalar_lea.vmem %s0, %s216
        %s218 = smul.u32 2, %s24
        %p219 = scmp.lt.s32.totalorder %s23, 2
        %s220 = scalar_select %p219, %s23, 2
        %p221 = scmp.lt.s32.totalorder %s218, 1
        %s222 = scalar_select %p221, %s218, 1
        %s223 = smul.addr %s220, 2
        %s224 = sadd.s32 %s222, %s223
        %s225 = smul.addr %s224, 4
        %s226 = scalar_lea.vmem %s1, %s225
        %s227 = smul.u32 2, %s24
        %s228 = smul.u32 2, %s24
        %v230 = vld [vmem:[%s217] sm:$0xff]
        %v231 = vld [vmem:[%s217 + $0x8] sm:$0xff]
        %v232 = vld [vmem:[%s217 + $0x10] sm:$0xff]
        %v233 = vld [vmem:[%s217 + $0x18] sm:$0xff]
        %v234 = vpack.c.bf16 %v231, %v230
        %v235 = vpack.c.bf16 %v233, %v232
        %v236 = vld [vmem:[%s226] sm:$0xf]
        %v237 = vld [vmem:[%s226 + $0x4] sm:$0xf]
        %v240 = vunpack.c.l.b16 %v236
        %v241 = vunpack.c.l.b16 %v237
        %v242 = vpack.c.b16 %v241, %v240
        %vm243 = vcmask 261120
        %v245 = vsel %vm243, %v242, 0
        %247 = vmatprep.subr.bf16.mxu0 0
        %248 = vmatpush1.bf16.msra.mxu0 %v234
        %249 = vmatprep.subr.bf16.mxu0 0
        %250 = vmatpush1.bf16.msra.mxu0 %v235
        %251 = vmatprep.subr.bf16.mxu0 0
        %252 = vmatpush1.bf16.msra.mxu0 0
        %253 = vmatprep.subr.bf16.mxu0 0
        %254 = vmatpush1.bf16.msra.mxu0 0
        %255 = vmatprep.subr.bf16.mxu0 0
        %256 = vmatpush1.bf16.msra.mxu0 0
        %257 = vmatprep.subr.bf16.mxu0 0
        %258 = vmatpush1.bf16.msra.mxu0 0
        %259 = vmatprep.subr.bf16.mxu0 0
        %260 = vmatpush1.bf16.msra.mxu0 0
        %261 = vmatprep.subr.bf16.mxu0 0
        %262 = vmatpush1.bf16.msra.mxu0 0
        %263 = vmatprep.subr.bf16.mxu0 0
        %264 = vmatpush1.bf16.msra.mxu0 0
        %265 = vmatprep.subr.bf16.mxu0 0
        %266 = vmatpush1.bf16.msra.mxu0 0
        %267 = vmatprep.subr.bf16.mxu0 0
        %268 = vmatpush1.bf16.msra.mxu0 0
        %269 = vmatprep.subr.bf16.mxu0 0
        %270 = vmatpush1.bf16.msra.mxu0 0
        %271 = vmatprep.subr.bf16.mxu0 0
        %272 = vmatpush1.bf16.msra.mxu0 0
        %273 = vmatprep.subr.bf16.mxu0 0
        %274 = vmatpush1.bf16.msra.mxu0 0
        %275 = vmatprep.subr.bf16.mxu0 0
        %276 = vmatpush1.bf16.msra.mxu0 0
        %277 = vmatprep.subr.bf16.mxu0 0
        %278 = vmatpush1.bf16.msra.mxu0 0
        %279 = vmatprep.mubr.bf16.mxu0 0
        %280 = vmatmul.mubr.bf16.gmra.mrb[0].mxu0 %v245
        %v281 = vpop.f32.mrb[0].mxu0
        %v282 = vadd.f32 0.0, %v281
        %v283 = vpop.f32.mrb[0].mxu0
        %v284 = vpop.f32.mrb[0].mxu0
        %v285 = vadd.f32 0.0, %v284
        %v286 = vpop.f32.mrb[0].mxu0
        %287 = vdwg.mxu0
        %v288 = vpack.c.bf16 %v285, %v282
        %v289 = vld [vmem:[%s2] sm:$0xf]
        %vm290 = vcmask 64512
        %v292 = vsel %vm290, %v288, 0
        %vm294 = vcmask 1043456
        %v296 = vsel %vm294, %v289, 0
        %298 = vmatprep.subr.bf16.mxu0 0
        %299 = vmatpush1.bf16.msra.mxu0 %v296
        %300 = vmatprep.subr.bf16.mxu0 0
        %301 = vmatpush1.bf16.msra.mxu0 0
        %302 = vmatprep.subr.bf16.mxu0 0
        %303 = vmatpush1.bf16.msra.mxu0 0
        %304 = vmatprep.subr.bf16.mxu0 0
        %305 = vmatpush1.bf16.msra.mxu0 0
        %306 = vmatprep.subr.bf16.mxu0 0
        %307 = vmatpush1.bf16.msra.mxu0 0
        %308 = vmatprep.subr.bf16.mxu0 0
        %309 = vmatpush1.bf16.msra.mxu0 0
        %310 = vmatprep.subr.bf16.mxu0 0
        %311 = vmatpush1.bf16.msra.mxu0 0
        %312 = vmatprep.subr.bf16.mxu0 0
        %313 = vmatpush1.bf16.msra.mxu0 0
        %314 = vmatprep.subr.bf16.mxu0 0
        %315 = vmatpush1.bf16.msra.mxu0 0
        %316 = vmatprep.subr.bf16.mxu0 0
        %317 = vmatpush1.bf16.msra.mxu0 0
        %318 = vmatprep.subr.bf16.mxu0 0
        %319 = vmatpush1.bf16.msra.mxu0 0
        %320 = vmatprep.subr.bf16.mxu0 0
        %321 = vmatpush1.bf16.msra.mxu0 0
        %322 = vmatprep.subr.bf16.mxu0 0
        %323 = vmatpush1.bf16.msra.mxu0 0
        %324 = vmatprep.subr.bf16.mxu0 0
        %325 = vmatpush1.bf16.msra.mxu0 0
        %326 = vmatprep.subr.bf16.mxu0 0
        %327 = vmatpush1.bf16.msra.mxu0 0
        %328 = vmatprep.subr.bf16.mxu0 0
        %329 = vmatpush1.bf16.msra.mxu0 0
        %330 = vmatprep.mubr.bf16.mxu0 0
        %331 = vmatmul.mubr.bf16.gmra.mrb[0].mxu0 %v292
        %v332 = vpop.f32.mrb[0].mxu0
        %v333 = vadd.f32 0.0, %v332
        %v334 = vpop.f32.mrb[0].mxu0
        %v335 = vpop.f32.mrb[0].mxu0
        %v336 = vadd.f32 0.0, %v335
        %v337 = vpop.f32.mrb[0].mxu0
        %338 = vdwg.mxu0
        %vm339 = vcmask 130048
        %340 = vst.msk [vmem:[%s212] sm:$0xff] %vm339, %v333
        %341 = vst.msk [vmem:[%s212 + $0x8] sm:$0xff] %vm339, %v336
        %s342 = sand.u32 %s123, 1
        %s343 = scalar_lea.sflag [#allocation3], %s342
        %s344 = sand.u32 %s123, 1
        %s345 = smul.addr %s344, 16
        %s346 = scalar_lea.vmem [#allocation2], %s345
        // Predicated region
        $region33: #{demosaic_forward.1} parent=31 // pred_check
          %p347 = pneg %p133
        $region34: #{demosaic_forward.1} parent=31 // pred_check_branch
          %349 = sbr.rel (%p347) target = $region36
        $region35: #{demosaic_forward.1} parent=31 // pred_region
          %s350 = smul.u32 2, %s24
          %s352 = ssub.s32 256, 256
          %353 = vsyncadd %s343, %s352
          %s354 = smul.addr %s23, 2
          %s355 = sadd.s32 %s350, %s354
          %s356 = smul.addr %s22, 6
          %s357 = sadd.s32 %s355, %s356
          %s358 = smul.addr %s357, 128
          %s359 = scalar_lea.hbm %s3, %s358
          %s360 = sshll.u32 %s346, 4
          %s361 = int_to_ptr.vmem [resolvable:$true] %s360
          %366 = dma.vmem_to_hbm [thread:$0]  %s361, 256, %s359, %s343, 128, 128, 8
        $region36: #{demosaic_forward.1} parent=31 // pred_fallthru
          _
      $region32: #{demosaic_forward.1} parent=5 // pred_fallthru
        _
      %p367 = scmp.le.s32.totalorder 2, %s12
      // Predicated region
      $region37: #{demosaic_forward.1} parent=5 // pred_check
        %p368 = pneg %p367
      $region38: #{demosaic_forward.1} parent=5 // pred_check_branch
        %370 = sbr.rel (%p368) target = $region40
      $region39: #{demosaic_forward.1} parent=5 // pred_region
        %s371 = ssub.s32 %s12, 2
        // Predicated region
        $region41: #{demosaic_forward.1} parent=39 // pred_check
          %p372 = pneg %p139
        $region42: #{demosaic_forward.1} parent=39 // pred_check_branch
          %374 = sbr.rel (%p372) target = $region44
        $region43: #{demosaic_forward.1} parent=39 // pred_region
          %s375 = sand.u32 %s124, 1
          %s376 = scalar_lea.sflag [#allocation3], %s375
          %s377 = sand.u32 %s124, 1
          %s378 = smul.addr %s377, 16
          %s379 = scalar_lea.vmem [#allocation2], %s378
          %380 = dma.done %s376, 256
        $region44: #{demosaic_forward.1} parent=39 // pred_fallthru
          _
      $region40: #{demosaic_forward.1} parent=5 // pred_fallthru
        _
    $region6: #{demosaic_forward.1} parent=1 // loop_footer
      %s16 = sadd.s32 1, %s12
    $region7: #{demosaic_forward.1} parent=1 // loop_footer_branch
      %11 = sbr.rel target = $region3
    $region8: #{demosaic_forward.1} parent=1 // loop_exit
      _
    %381 = vsyncpa [#allocation3], 1
    %s382 = scalar_lea.sflag [#allocation3], 1
    %383 = vsyncpa %s382, 1

</llo_original>
